<compile_context>
chip_gen: v7x
topology: tpu7x:2x2x1
jax: 0.10.0
libtpu: 0.0.40
codegen_flags: <defaults>
</compile_context>

<pallas_src>
import jax
import jax.numpy as jnp
from jax.experimental import pallas as pl
from jax.experimental.pallas import tpu as pltpu

NDF = 64
C2 = 2 * NDF          # 128 channels after conv2
EPS = 1e-5
NEG_SLOPE = 0.2


def _leaky(x):
    return jnp.where(x > 0, x, NEG_SLOPE * x)


# --------------------------- stage 1: BN statistics --------------------------
def stats_kernel(x_ref, w1_ref, b1_ref, w2_ref, sum_ref, sq_ref):
    # x_ref: (C, tile_p)  channel-major pixel tile
    h1 = jnp.dot(w1_ref[...], x_ref[...], preferred_element_type=jnp.float32)
    h1 = _leaky(h1 + b1_ref[...])                                # (64, tile_p)
    h2 = jnp.dot(w2_ref[...], h1, preferred_element_type=jnp.float32)  # (128, tile_p)
    # per-tile partial sums over the pixel (lane) axis
    sum_ref[0] = jnp.sum(h2, axis=1, keepdims=True)              # (C2, 1)
    sq_ref[0] = jnp.sum(h2 * h2, axis=1, keepdims=True)          # (C2, 1)


# ------------------- stage 2: recompute + BN + leaky + conv3 -----------------
def fwd_kernel(x_ref, w1_ref, b1_ref, w2_ref, scale_ref, shift_ref, w3_ref, out_ref):
    h1 = jnp.dot(w1_ref[...], x_ref[...], preferred_element_type=jnp.float32)
    h1 = _leaky(h1 + b1_ref[...])                                # (64, tile_p)
    h2 = jnp.dot(w2_ref[...], h1, preferred_element_type=jnp.float32)  # (128, tile_p)
    hn = _leaky(h2 * scale_ref[...] + shift_ref[...])            # folded BN affine
    # conv3 (128 -> 1): VPU multiply + sublane reduce -> lane-dense (1, tile_p)
    out_ref[...] = jnp.sum(hn * w3_ref[...], axis=0, keepdims=True)


def _pick_tile(P, cap):
    t = min(cap, P)
    t -= t % 128
    while t > 128 and P % t != 0:
        t -= 128
    return t


# ----------------------------------- wrapper ---------------------------------
def pixel_discriminator(x_nchw, params, *, tile_p_max=2048):
    w1, b1, w2, gamma, beta, w3 = params  # torch-shaped: (out,in), (out,), ...
    N, C, H, W = x_nchw.shape
    P = N * H * W
    assert P % 128 == 0, "N*H*W must be a multiple of 128"
    tile_p = _pick_tile(P, tile_p_max)
    n_tiles = P // tile_p

    # channel-major flattened pixels: (C, P)
    x_cp = jnp.transpose(x_nchw, (1, 0, 2, 3)).reshape(C, P).astype(jnp.float32)

    w1f = w1.astype(jnp.float32)                    # (64, C)
    b1c = b1.reshape(NDF, 1).astype(jnp.float32)    # (64, 1)
    w2f = w2.astype(jnp.float32)                    # (128, 64)
    w3c = w3.reshape(C2, 1).astype(jnp.float32)     # (128, 1)

    cparams = pltpu.CompilerParams(
        dimension_semantics=("parallel",),
        vmem_limit_bytes=32 * 1024 * 1024,
    )

    # ---- stage 1: per-tile channel sum / sum-of-squares of h2 ----
    sums, sqs = pl.pallas_call(
        stats_kernel,
        out_shape=(
            jax.ShapeDtypeStruct((n_tiles, C2, 1), jnp.float32),
            jax.ShapeDtypeStruct((n_tiles, C2, 1), jnp.float32),
        ),
        grid_spec=pltpu.PrefetchScalarGridSpec(
            num_scalar_prefetch=0,
            grid=(n_tiles,),
            in_specs=[
                pl.BlockSpec((C, tile_p), lambda i: (0, i)),
                pl.BlockSpec((NDF, C), lambda i: (0, 0)),
                pl.BlockSpec((NDF, 1), lambda i: (0, 0)),
                pl.BlockSpec((C2, NDF), lambda i: (0, 0)),
            ],
            out_specs=[
                pl.BlockSpec((1, C2, 1), lambda i: (i, 0, 0)),
                pl.BlockSpec((1, C2, 1), lambda i: (i, 0, 0)),
            ],
        ),
        compiler_params=cparams,
    )(x_cp, w1f, b1c, w2f)

    # ---- glue: finalize BatchNorm batch stats, fold affine into scale/shift ----
    ssum = jnp.sum(sums[:, :, 0], axis=0)                 # (C2,) f32 reduction
    ssq = jnp.sum(sqs[:, :, 0], axis=0)
    mean = ssum / P
    var = jnp.maximum(ssq / P - mean * mean, 0.0)         # biased variance (BN train)
    invstd = jax.lax.rsqrt(var + EPS)
    scale_v = gamma.astype(jnp.float32) * invstd
    shift_v = beta.astype(jnp.float32) - mean * scale_v
    scale = scale_v.reshape(C2, 1)
    shift = shift_v.reshape(C2, 1)

    # ---- stage 2: recompute h2, apply folded BN + leaky + conv3 ----
    out_row = pl.pallas_call(
        fwd_kernel,
        out_shape=jax.ShapeDtypeStruct((1, P), jnp.float32),
        grid_spec=pltpu.PrefetchScalarGridSpec(
            num_scalar_prefetch=0,
            grid=(n_tiles,),
            in_specs=[
                pl.BlockSpec((C, tile_p), lambda i: (0, i)),
                pl.BlockSpec((NDF, C), lambda i: (0, 0)),
                pl.BlockSpec((NDF, 1), lambda i: (0, 0)),
                pl.BlockSpec((C2, NDF), lambda i: (0, 0)),
                pl.BlockSpec((C2, 1), lambda i: (0, 0)),
                pl.BlockSpec((C2, 1), lambda i: (0, 0)),
                pl.BlockSpec((C2, 1), lambda i: (0, 0)),
            ],
            out_specs=pl.BlockSpec((1, tile_p), lambda i: (0, i)),
        ),
        compiler_params=cparams,
    )(x_cp, w1f, b1c, w2f, scale, shift, w3c)

    # (1, P) -> (N, H, W) -> (N, 1, H, W)
    return out_row.reshape(N, H, W)[:, None, :, :]


# ------------------------------ pure-JAX reference ---------------------------
def reference_forward(x_nchw, params):
    w1, b1, w2, gamma, beta, w3 = params
    x = jnp.transpose(x_nchw, (0, 2, 3, 1)).astype(jnp.float32)   # NHWC
    h1 = _leaky(jnp.einsum("nhwc,oc->nhwo", x, w1) + b1)
    h2 = jnp.einsum("nhwc,oc->nhwo", h1, w2)
    mean = jnp.mean(h2, axis=(0, 1, 2))
    var = jnp.mean((h2 - mean) ** 2, axis=(0, 1, 2))              # biased (BN train)
    hn = _leaky((h2 - mean) / jnp.sqrt(var + EPS) * gamma + beta)
    out = jnp.einsum("nhwc,oc->nhwo", hn, w3)
    return jnp.transpose(out, (0, 3, 1, 2))


if __name__ == "__main__":
    key = jax.random.PRNGKey(0)
    input_nc = 4
    N, H, W = 2, 16, 16
    k_x, k1, kb1, k2, kg, kb, k3 = jax.random.split(key, 7)

    x = jax.random.normal(k_x, (N, input_nc, H, W), dtype=jnp.float32)

    # deterministic synthetic parameters (torch Conv2d weights with k=1 squeezed)
    w1 = jax.random.normal(k1, (NDF, input_nc), dtype=jnp.float32) * 0.1
    b1 = jax.random.normal(kb1, (NDF,), dtype=jnp.float32) * 0.1
    w2 = jax.random.normal(k2, (2 * NDF, NDF), dtype=jnp.float32) * 0.1
    gamma = 1.0 + jax.random.normal(kg, (2 * NDF,), dtype=jnp.float32) * 0.05
    beta = jax.random.normal(kb, (2 * NDF,), dtype=jnp.float32) * 0.05
    w3 = jax.random.normal(k3, (1, 2 * NDF), dtype=jnp.float32) * 0.1
    params = (w1, b1, w2, gamma, beta, w3)

    out = jax.block_until_ready(pixel_discriminator(x, params))
    ref = jax.block_until_ready(reference_forward(x, params))

    assert out.shape == (N, 1, H, W), out.shape
    assert jnp.allclose(out, ref, rtol=1e-3, atol=1e-3), float(jnp.max(jnp.abs(out - ref)))
    print("KERNEL_OK")
</pallas_src>

<mosaic_0001>
module attributes {stable_mosaic.version = 11 : i64} {
  func.func @stats_kernel(%arg0: i32, %arg1: memref<4x512xf32, #tpu.memory_space<vmem>>, %arg2: memref<64x4xf32, #tpu.memory_space<vmem>>, %arg3: memref<64x1xf32, #tpu.memory_space<vmem>>, %arg4: memref<128x64xf32, #tpu.memory_space<vmem>>, %arg5: memref<1x128x1xf32, #tpu.memory_space<vmem>>, %arg6: memref<1x128x1xf32, #tpu.memory_space<vmem>>) attributes {dimension_semantics = [#tpu.dimension_semantics<parallel>], iteration_bounds = array<i64: 1>, scalar_prefetch = 0 : i64, scratch_operands = 0 : i64, tpu.core_type = #tpu.core_type<tc>, window_params = [{transform_indices = @transform_0, window_bounds = array<i64: 4, 512>}, {pipeline_mode = #tpu.pipeline_mode<synchronous>, transform_indices = @transform_1, window_bounds = array<i64: 64, 4>}, {pipeline_mode = #tpu.pipeline_mode<synchronous>, transform_indices = @transform_2, window_bounds = array<i64: 64, 1>}, {pipeline_mode = #tpu.pipeline_mode<synchronous>, transform_indices = @transform_3, window_bounds = array<i64: 128, 64>}, {transform_indices = @transform_4, window_bounds = array<i64: 1, 128, 1>}, {transform_indices = @transform_5, window_bounds = array<i64: 1, 128, 1>}]} {
    %c0 = arith.constant 0 : index
    %c0_0 = arith.constant 0 : index
    %0 = vector.load %arg2[%c0, %c0_0] : memref<64x4xf32, #tpu.memory_space<vmem>>, vector<64x4xf32>
    %c0_1 = arith.constant 0 : index
    %c0_2 = arith.constant 0 : index
    %1 = vector.load %arg1[%c0_1, %c0_2] : memref<4x512xf32, #tpu.memory_space<vmem>>, vector<4x512xf32>
    %cst = arith.constant dense<0.000000e+00> : vector<64x512xf32>
    %2 = tpu.matmul %0, %1, %cst {dimension_numbers = #tpu.dot_dimension_numbers<[1], [0], [0], [1], [0, 0, 1, 1], [], []>} : vector<64x4xf32>, vector<4x512xf32>, vector<64x512xf32> -> vector<64x512xf32>
    %c0_3 = arith.constant 0 : index
    %c0_4 = arith.constant 0 : index
    %3 = vector.load %arg3[%c0_3, %c0_4] : memref<64x1xf32, #tpu.memory_space<vmem>>, vector<64x1xf32>
    %4 = vector.broadcast %3 : vector<64x1xf32> to vector<64x512xf32>
    %5 = arith.addf %2, %4 : vector<64x512xf32>
    %cst_5 = arith.constant 0.000000e+00 : f32
    %6 = vector.broadcast %cst_5 : f32 to vector<64x512xf32>
    %7 = arith.cmpf ogt, %5, %6 : vector<64x512xf32>
    %cst_6 = arith.constant 2.000000e-01 : f32
    %8 = vector.broadcast %cst_6 : f32 to vector<64x512xf32>
    %9 = arith.mulf %8, %5 : vector<64x512xf32>
    %10 = arith.select %7, %5, %9 : vector<64x512xi1>, vector<64x512xf32>
    %c0_7 = arith.constant 0 : index
    %c0_8 = arith.constant 0 : index
    %11 = vector.load %arg4[%c0_7, %c0_8] : memref<128x64xf32, #tpu.memory_space<vmem>>, vector<128x64xf32>
    %cst_9 = arith.constant dense<0.000000e+00> : vector<128x512xf32>
    %12 = tpu.matmul %11, %10, %cst_9 {dimension_numbers = #tpu.dot_dimension_numbers<[1], [0], [0], [1], [0, 0, 1, 1], [], []>} : vector<128x64xf32>, vector<64x512xf32>, vector<128x512xf32> -> vector<128x512xf32>
    %cst_10 = arith.constant dense<0.000000e+00> : vector<128xf32>
    %13 = vector.multi_reduction <add>, %12, %cst_10 [1] : vector<128x512xf32> to vector<128xf32>
    %14 = vector.shape_cast %13 : vector<128xf32> to vector<128x1xf32>
    %c0_11 = arith.constant 0 : index
    %c0_12 = arith.constant 0 : index
    %c0_13 = arith.constant 0 : index
    %15 = vector.load %arg5[%c0_11, %c0_12, %c0_13] : memref<1x128x1xf32, #tpu.memory_space<vmem>>, vector<1x128x1xf32>
    %16 = vector.shape_cast %15 : vector<1x128x1xf32> to vector<128x1xf32>
    %17 = vector.shape_cast %14 : vector<128x1xf32> to vector<1x128x1xf32>
    tpu.vector_store %arg5[%c0_11, %c0_12, %c0_13], %17 {strides = array<i32>} : memref<1x128x1xf32, #tpu.memory_space<vmem>>, vector<1x128x1xf32>,
    %18 = arith.mulf %12, %12 : vector<128x512xf32>
    %cst_14 = arith.constant dense<0.000000e+00> : vector<128xf32>
    %19 = vector.multi_reduction <add>, %18, %cst_14 [1] : vector<128x512xf32> to vector<128xf32>
    %20 = vector.shape_cast %19 : vector<128xf32> to vector<128x1xf32>
    %c0_15 = arith.constant 0 : index
    %c0_16 = arith.constant 0 : index
    %c0_17 = arith.constant 0 : index
    %21 = vector.load %arg6[%c0_15, %c0_16, %c0_17] : memref<1x128x1xf32, #tpu.memory_space<vmem>>, vector<1x128x1xf32>
    %22 = vector.shape_cast %21 : vector<1x128x1xf32> to vector<128x1xf32>
    %23 = vector.shape_cast %20 : vector<128x1xf32> to vector<1x128x1xf32>
    tpu.vector_store %arg6[%c0_15, %c0_16, %c0_17], %23 {strides = array<i32>} : memref<1x128x1xf32, #tpu.memory_space<vmem>>, vector<1x128x1xf32>,
    return
  }
  func.func @transform_0(%arg0: i32) -> (i32, i32) {
    %c0_i32 = arith.constant 0 : i32
    %c0_i32_0 = arith.constant 0 : i32
    return %c0_i32, %arg0 : i32, i32
  }
  func.func @transform_1(%arg0: i32) -> (i32, i32) {
    %c0_i32 = arith.constant 0 : i32
    %c0_i32_0 = arith.constant 0 : i32
    %c0_i32_1 = arith.constant 0 : i32
    return %c0_i32, %c0_i32_0 : i32, i32
  }
  func.func @transform_2(%arg0: i32) -> (i32, i32) {
    %c0_i32 = arith.constant 0 : i32
    %c0_i32_0 = arith.constant 0 : i32
    %c0_i32_1 = arith.constant 0 : i32
    return %c0_i32, %c0_i32_0 : i32, i32
  }
  func.func @transform_3(%arg0: i32) -> (i32, i32) {
    %c0_i32 = arith.constant 0 : i32
    %c0_i32_0 = arith.constant 0 : i32
    %c0_i32_1 = arith.constant 0 : i32
    return %c0_i32, %c0_i32_0 : i32, i32
  }
  func.func @transform_4(%arg0: i32) -> (i32, i32, i32) {
    %c0_i32 = arith.constant 0 : i32
    %c0_i32_0 = arith.constant 0 : i32
    %c0_i32_1 = arith.constant 0 : i32
    return %arg0, %c0_i32, %c0_i32_0 : i32, i32, i32
  }
  func.func @transform_5(%arg0: i32) -> (i32, i32, i32) {
    %c0_i32 = arith.constant 0 : i32
    %c0_i32_0 = arith.constant 0 : i32
    %c0_i32_1 = arith.constant 0 : i32
    return %arg0, %c0_i32, %c0_i32_0 : i32, i32, i32
  }
}

</mosaic_0001>

<llo_original>
// kernel: tpu_custom_call.1
$region0: #{tpu_custom_call.1}
  #allocation0 [shape = 'u32[]', space=smem, size = 0x4, offset = 0x4, fixed_abs, tag = 'smem constant byte address 0x4 - core index']
  #allocation1 [shape = 'u32[144,128]{1,0:T(1,128)}', space=vmem, size = 0x12000, scoped, tag = 'internal scratch']
  %s0 = inlined_call_operand.vmem [shape: f32[4,512], index: 0, kind: input, shape index: {}]
  %s1 = inlined_call_operand.vmem [shape: f32[64,4], index: 1, kind: input, shape index: {}]
  %s2 = inlined_call_operand.vmem [shape: f32[64,1], index: 2, kind: input, shape index: {}]
  %s3 = inlined_call_operand.vmem [shape: f32[128,64], index: 3, kind: input, shape index: {}]
  %s4 = inlined_call_operand.vmem [shape: f32[1,128,1], index: 4, kind: output, shape index: {0}]
  %s5 = inlined_call_operand.vmem [shape: f32[1,128,1], index: 5, kind: output, shape index: {1}]
  %6 = xla_tuple %s4, %s5
  %s7 = sld [smem:[#allocation0]]
  $region34: #{tpu_custom_call.1} parent=0
    _
  %s9 = ssub.s32 1, %s7
  %s10 = scalar_select 0, %s9, %s7
  // Predicated region
  $region2: #{tpu_custom_call.1} parent=0 // pred_check
    _
  $region3: #{tpu_custom_call.1} parent=0 // pred_check_branch
    %12 = sbr.rel (0) target = $region5
  $region4: #{tpu_custom_call.1} parent=0 // pred_region
    _
  $region5: #{tpu_custom_call.1} parent=0 // pred_fallthru
    _
  // Predicated region
  $region6: #{tpu_custom_call.1} parent=0 // pred_check
    _
  $region7: #{tpu_custom_call.1} parent=0 // pred_check_branch
    %14 = sbr.rel (0) target = $region9
  $region8: #{tpu_custom_call.1} parent=0 // pred_region
    _
  $region9: #{tpu_custom_call.1} parent=0 // pred_fallthru
    _
  // Predicated region
  $region10: #{tpu_custom_call.1} parent=0 // pred_check
    _
  $region11: #{tpu_custom_call.1} parent=0 // pred_check_branch
    %16 = sbr.rel (0) target = $region13
  $region12: #{tpu_custom_call.1} parent=0 // pred_region
    _
  $region13: #{tpu_custom_call.1} parent=0 // pred_fallthru
    _
  // Predicated region
  $region14: #{tpu_custom_call.1} parent=0 // pred_check
    _
  $region15: #{tpu_custom_call.1} parent=0 // pred_check_branch
    %18 = sbr.rel (0) target = $region17
  $region16: #{tpu_custom_call.1} parent=0 // pred_region
    _
  $region17: #{tpu_custom_call.1} parent=0 // pred_fallthru
    _
  %v19 = vld [vmem:[%s1] sm:$0xff]
  %v20 = vld [vmem:[%s1 + $0x8] sm:$0xff]
  %v21 = vld [vmem:[%s1 + $0x10] sm:$0xff]
  %v22 = vld [vmem:[%s1 + $0x18] sm:$0xff]
  %v23 = vld [vmem:[%s1 + $0x20] sm:$0xff]
  %v24 = vld [vmem:[%s1 + $0x28] sm:$0xff]
  %v25 = vld [vmem:[%s1 + $0x30] sm:$0xff]
  %v26 = vld [vmem:[%s1 + $0x38] sm:$0xff]
  %v27 = vld [vmem:[%s0] sm:$0xff]
  %v28 = vld [vmem:[%s0 + $0x8] sm:$0xff]
  %v29 = vld [vmem:[%s2] sm:$0xff]
  %v30 = vld [vmem:[%s2 + $0x8] sm:$0xff]
  %v31 = vld [vmem:[%s2 + $0x10] sm:$0xff]
  %v32 = vld [vmem:[%s2 + $0x18] sm:$0xff]
  %v33 = vld [vmem:[%s2 + $0x20] sm:$0xff]
  %v34 = vld [vmem:[%s2 + $0x28] sm:$0xff]
  %v35 = vld [vmem:[%s2 + $0x30] sm:$0xff]
  %v36 = vld [vmem:[%s2 + $0x38] sm:$0xff]
  %38 = vset.pattern.permute.xlu0 0
  %39 = vperm.xlu0 %38, %v29
  %v40 = vpop.permute.xlu0 %39
  %43 = vset.pattern.permute.xlu0 0
  %44 = vperm.xlu0 %43, %v30
  %v45 = vpop.permute.xlu0 %44
  %48 = vset.pattern.permute.xlu0 0
  %49 = vperm.xlu0 %48, %v31
  %v50 = vpop.permute.xlu0 %49
  %53 = vset.pattern.permute.xlu0 0
  %54 = vperm.xlu0 %53, %v32
  %v55 = vpop.permute.xlu0 %54
  %58 = vset.pattern.permute.xlu0 0
  %59 = vperm.xlu0 %58, %v33
  %v60 = vpop.permute.xlu0 %59
  %63 = vset.pattern.permute.xlu0 0
  %64 = vperm.xlu0 %63, %v34
  %v65 = vpop.permute.xlu0 %64
  %68 = vset.pattern.permute.xlu0 0
  %69 = vperm.xlu0 %68, %v35
  %v70 = vpop.permute.xlu0 %69
  %73 = vset.pattern.permute.xlu0 0
  %74 = vperm.xlu0 %73, %v36
  %v75 = vpop.permute.xlu0 %74
  %v79 = vcombine.high %v27, %v27
  %v80 = vcombine.high %v28, %v28
  %vm81 = vcmask 31744
  %v83 = vsel %vm81, %v19, 0
  %v86 = vsel %vm81, %v20, 0
  %v89 = vsel %vm81, %v21, 0
  %v92 = vsel %vm81, %v22, 0
  %v95 = vsel %vm81, %v23, 0
  %v98 = vsel %vm81, %v24, 0
  %v101 = vsel %vm81, %v25, 0
  %v104 = vsel %vm81, %v26, 0
  %vm106 = vcmask 1043456
  %v107 = vsel %vm106, %v27, 0
  %v109 = vsel %vm106, %v79, 0
  %v111 = vsel %vm106, %v28, 0
  %v113 = vsel %vm106, %v80, 0
  %115 = vmatprep.subr.mxu0 %v109
  %116 = vmatpush1.msra.mxu0 %v107
  %117 = vmatprep.subr.mxu0 0.0
  %118 = vmatpush1.msra.mxu0 0.0
  %119 = vmatprep.subr.mxu0 0.0
  %120 = vmatpush1.msra.mxu0 0.0
  %121 = vmatprep.subr.mxu0 0.0
  %122 = vmatpush1.msra.mxu0 0.0
  %123 = vmatprep.subr.mxu0 0.0
  %124 = vmatpush1.msra.mxu0 0.0
  %125 = vmatprep.subr.mxu0 0.0
  %126 = vmatpush1.msra.mxu0 0.0
  %127 = vmatprep.subr.mxu0 0.0
  %128 = vmatpush1.msra.mxu0 0.0
  %129 = vmatprep.subr.mxu0 0.0
  %130 = vmatpush1.msra.mxu0 0.0
  %131 = vmatprep.subr.mxu0 0.0
  %132 = vmatpush1.msra.mxu0 0.0
  %133 = vmatprep.subr.mxu0 0.0
  %134 = vmatpush1.msra.mxu0 0.0
  %135 = vmatprep.subr.mxu0 0.0
  %136 = vmatpush1.msra.mxu0 0.0
  %137 = vmatprep.subr.mxu0 0.0
  %138 = vmatpush1.msra.mxu0 0.0
  %139 = vmatprep.subr.mxu0 0.0
  %140 = vmatpush1.msra.mxu0 0.0
  %141 = vmatprep.subr.mxu0 0.0
  %142 = vmatpush1.msra.mxu0 0.0
  %143 = vmatprep.subr.mxu0 0.0
  %144 = vmatpush1.msra.mxu0 0.0
  %145 = vmatprep.subr.mxu0 0.0
  %146 = vmatpush1.msra.mxu0 0.0
  %147 = vmatprep.subr.mxu0 0.0
  %148 = vmatpush1.msra.mxu0 0.0
  %149 = vmatprep.subr.mxu0 0.0
  %150 = vmatpush1.msra.mxu0 0.0
  %151 = vmatprep.subr.mxu0 0.0
  %152 = vmatpush1.msra.mxu0 0.0
  %153 = vmatprep.subr.mxu0 0.0
  %154 = vmatpush1.msra.mxu0 0.0
  %155 = vmatprep.subr.mxu0 0.0
  %156 = vmatpush1.msra.mxu0 0.0
  %157 = vmatprep.subr.mxu0 0.0
  %158 = vmatpush1.msra.mxu0 0.0
  %159 = vmatprep.subr.mxu0 0.0
  %160 = vmatpush1.msra.mxu0 0.0
  %161 = vmatprep.subr.mxu0 0.0
  %162 = vmatpush1.msra.mxu0 0.0
  %163 = vmatprep.subr.mxu0 0.0
  %164 = vmatpush1.msra.mxu0 0.0
  %165 = vmatprep.subr.mxu0 0.0
  %166 = vmatpush1.msra.mxu0 0.0
  %167 = vmatprep.subr.mxu0 0.0
  %168 = vmatpush1.msra.mxu0 0.0
  %169 = vmatprep.subr.mxu0 0.0
  %170 = vmatpush1.msra.mxu0 0.0
  %171 = vmatprep.subr.mxu0 0.0
  %172 = vmatpush1.msra.mxu0 0.0
  %173 = vmatprep.subr.mxu0 0.0
  %174 = vmatpush1.msra.mxu0 0.0
  %175 = vmatprep.subr.mxu0 0.0
  %176 = vmatpush1.msra.mxu0 0.0
  %177 = vmatprep.subr.mxu0 0.0
  %178 = vmatpush1.msra.mxu0 0.0
  %179 = vmatprep.mubr.f32.mxu0 0.0
  %180 = vmatmul.mubr.f32.gmra.mrb[0].mxu0 %v83
  %v181 = vpop.f32.mrb[0].mxu0
  %v182 = vadd.f32 %v40, %v181
  %v183 = vpop.f32.mrb[0].mxu0
  %v184 = vadd.f32 %v40, %v183
  %185 = vmatprep.mubr.f32.mxu0 0.0
  %186 = vmatmul.mubr.f32.gmra.mrb[0].mxu0 %v86
  %v187 = vpop.f32.mrb[0].mxu0
  %v188 = vadd.f32 %v45, %v187
  %v189 = vpop.f32.mrb[0].mxu0
  %v190 = vadd.f32 %v45, %v189
  %191 = vmatprep.mubr.f32.mxu0 0.0
  %192 = vmatmul.mubr.f32.gmra.mrb[0].mxu0 %v89
  %v193 = vpop.f32.mrb[0].mxu0
  %v194 = vadd.f32 %v50, %v193
  %v195 = vpop.f32.mrb[0].mxu0
  %v196 = vadd.f32 %v50, %v195
  %197 = vmatprep.mubr.f32.mxu0 0.0
  %198 = vmatmul.mubr.f32.gmra.mrb[0].mxu0 %v92
  %v199 = vpop.f32.mrb[0].mxu0
  %v200 = vadd.f32 %v55, %v199
  %v201 = vpop.f32.mrb[0].mxu0
  %v202 = vadd.f32 %v55, %v201
  %203 = vmatprep.mubr.f32.mxu0 0.0
  %204 = vmatmul.mubr.f32.gmra.mrb[0].mxu0 %v95
  %v205 = vpop.f32.mrb[0].mxu0
  %v206 = vadd.f32 %v60, %v205
  %v207 = vpop.f32.mrb[0].mxu0
  %v208 = vadd.f32 %v60, %v207
  %209 = vmatprep.mubr.f32.mxu0 0.0
  %210 = vmatmul.mubr.f32.gmra.mrb[0].mxu0 %v98
  %v211 = vpop.f32.mrb[0].mxu0
  %v212 = vadd.f32 %v65, %v211
  %v213 = vpop.f32.mrb[0].mxu0
  %v214 = vadd.f32 %v65, %v213
  %215 = vmatprep.mubr.f32.mxu0 0.0
  %216 = vmatmul.mubr.f32.gmra.mrb[0].mxu0 %v101
  %v217 = vpop.f32.mrb[0].mxu0
  %v218 = vadd.f32 %v70, %v217
  %v219 = vpop.f32.mrb[0].mxu0
  %v220 = vadd.f32 %v70, %v219
  %221 = vmatprep.mubr.f32.mxu0 0.0
  %222 = vmatmul.mubr.f32.gmra.mrb[0].mxu0 %v104
  %v223 = vpop.f32.mrb[0].mxu0
  %v224 = vadd.f32 %v75, %v223
  %v225 = vpop.f32.mrb[0].mxu0
  %v226 = vadd.f32 %v75, %v225
  %227 = vdwg.mxu0
  %228 = vmatprep.subr.mxu0 %v113
  %229 = vmatpush1.msra.mxu0 %v111
  %230 = vmatprep.subr.mxu0 0.0
  %231 = vmatpush1.msra.mxu0 0.0
  %232 = vmatprep.subr.mxu0 0.0
  %233 = vmatpush1.msra.mxu0 0.0
  %234 = vmatprep.subr.mxu0 0.0
  %235 = vmatpush1.msra.mxu0 0.0
  %236 = vmatprep.subr.mxu0 0.0
  %237 = vmatpush1.msra.mxu0 0.0
  %238 = vmatprep.subr.mxu0 0.0
  %239 = vmatpush1.msra.mxu0 0.0
  %240 = vmatprep.subr.mxu0 0.0
  %241 = vmatpush1.msra.mxu0 0.0
  %242 = vmatprep.subr.mxu0 0.0
  %243 = vmatpush1.msra.mxu0 0.0
  %244 = vmatprep.subr.mxu0 0.0
  %245 = vmatpush1.msra.mxu0 0.0
  %246 = vmatprep.subr.mxu0 0.0
  %247 = vmatpush1.msra.mxu0 0.0
  %248 = vmatprep.subr.mxu0 0.0
  %249 = vmatpush1.msra.mxu0 0.0
  %250 = vmatprep.subr.mxu0 0.0
  %251 = vmatpush1.msra.mxu0 0.0
  %252 = vmatprep.subr.mxu0 0.0
  %253 = vmatpush1.msra.mxu0 0.0
  %254 = vmatprep.subr.mxu0 0.0
  %255 = vmatpush1.msra.mxu0 0.0
  %256 = vmatprep.subr.mxu0 0.0
  %257 = vmatpush1.msra.mxu0 0.0
  %258 = vmatprep.subr.mxu0 0.0
  %259 = vmatpush1.msra.mxu0 0.0
  %260 = vmatprep.subr.mxu0 0.0
  %261 = vmatpush1.msra.mxu0 0.0
  %262 = vmatprep.subr.mxu0 0.0
  %263 = vmatpush1.msra.mxu0 0.0
  %264 = vmatprep.subr.mxu0 0.0
  %265 = vmatpush1.msra.mxu0 0.0
  %266 = vmatprep.subr.mxu0 0.0
  %267 = vmatpush1.msra.mxu0 0.0
  %268 = vmatprep.subr.mxu0 0.0
  %269 = vmatpush1.msra.mxu0 0.0
  %270 = vmatprep.subr.mxu0 0.0
  %271 = vmatpush1.msra.mxu0 0.0
  %272 = vmatprep.subr.mxu0 0.0
  %273 = vmatpush1.msra.mxu0 0.0
  %274 = vmatprep.subr.mxu0 0.0
  %275 = vmatpush1.msra.mxu0 0.0
  %276 = vmatprep.subr.mxu0 0.0
  %277 = vmatpush1.msra.mxu0 0.0
  %278 = vmatprep.subr.mxu0 0.0
  %279 = vmatpush1.msra.mxu0 0.0
  %280 = vmatprep.subr.mxu0 0.0
  %281 = vmatpush1.msra.mxu0 0.0
  %282 = vmatprep.subr.mxu0 0.0
  %283 = vmatpush1.msra.mxu0 0.0
  %284 = vmatprep.subr.mxu0 0.0
  %285 = vmatpush1.msra.mxu0 0.0
  %286 = vmatprep.subr.mxu0 0.0
  %287 = vmatpush1.msra.mxu0 0.0
  %288 = vmatprep.subr.mxu0 0.0
  %289 = vmatpush1.msra.mxu0 0.0
  %290 = vmatprep.subr.mxu0 0.0
  %291 = vmatpush1.msra.mxu0 0.0
  %292 = vmatprep.mubr.f32.mxu0 0.0
  %293 = vmatmul.mubr.f32.gmra.mrb[0].mxu0 %v83
  %v294 = vpop.f32.mrb[0].mxu0
  %v295 = vadd.f32 %v40, %v294
  %v296 = vpop.f32.mrb[0].mxu0
  %v297 = vadd.f32 %v40, %v296
  %298 = vmatprep.mubr.f32.mxu0 0.0
  %299 = vmatmul.mubr.f32.gmra.mrb[0].mxu0 %v86
  %v300 = vpop.f32.mrb[0].mxu0
  %v301 = vadd.f32 %v45, %v300
  %v302 = vpop.f32.mrb[0].mxu0
  %v303 = vadd.f32 %v45, %v302
  %304 = vmatprep.mubr.f32.mxu0 0.0
  %305 = vmatmul.mubr.f32.gmra.mrb[0].mxu0 %v89
  %v306 = vpop.f32.mrb[0].mxu0
  %v307 = vadd.f32 %v50, %v306
  %v308 = vpop.f32.mrb[0].mxu0
  %v309 = vadd.f32 %v50, %v308
  %310 = vmatprep.mubr.f32.mxu0 0.0
  %311 = vmatmul.mubr.f32.gmra.mrb[0].mxu0 %v92
  %v312 = vpop.f32.mrb[0].mxu0
  %v313 = vadd.f32 %v55, %v312
  %v314 = vpop.f32.mrb[0].mxu0
  %v315 = vadd.f32 %v55, %v314
  %316 = vmatprep.mubr.f32.mxu0 0.0
  %317 = vmatmul.mubr.f32.gmra.mrb[0].mxu0 %v95
  %v318 = vpop.f32.mrb[0].mxu0
  %v319 = vadd.f32 %v60, %v318
  %v320 = vpop.f32.mrb[0].mxu0
  %v321 = vadd.f32 %v60, %v320
  %322 = vmatprep.mubr.f32.mxu0 0.0
  %323 = vmatmul.mubr.f32.gmra.mrb[0].mxu0 %v98
  %v324 = vpop.f32.mrb[0].mxu0
  %v325 = vadd.f32 %v65, %v324
  %v326 = vpop.f32.mrb[0].mxu0
  %v327 = vadd.f32 %v65, %v326
  %328 = vmatprep.mubr.f32.mxu0 0.0
  %329 = vmatmul.mubr.f32.gmra.mrb[0].mxu0 %v101
  %v330 = vpop.f32.mrb[0].mxu0
  %v331 = vadd.f32 %v70, %v330
  %v332 = vpop.f32.mrb[0].mxu0
  %v333 = vadd.f32 %v70, %v332
  %334 = vmatprep.mubr.f32.mxu0 0.0
  %335 = vmatmul.mubr.f32.gmra.mrb[0].mxu0 %v104
  %v336 = vpop.f32.mrb[0].mxu0
  %v337 = vadd.f32 %v75, %v336
  %v338 = vpop.f32.mrb[0].mxu0
  %v339 = vadd.f32 %v75, %v338
  %340 = vdwg.mxu0
  %vm341 = vcmp.gt.f32.partialorder %v182, 0.0
  %vm342 = vcmp.gt.f32.partialorder %v184, 0.0
  %vm343 = vcmp.gt.f32.partialorder %v295, 0.0
  %vm344 = vcmp.gt.f32.partialorder %v297, 0.0
  %vm345 = vcmp.gt.f32.partialorder %v188, 0.0
  %vm346 = vcmp.gt.f32.partialorder %v190, 0.0
  %vm347 = vcmp.gt.f32.partialorder %v301, 0.0
  %vm348 = vcmp.gt.f32.partialorder %v303, 0.0
  %vm349 = vcmp.gt.f32.partialorder %v194, 0.0
  %vm350 = vcmp.gt.f32.partialorder %v196, 0.0
  %vm351 = vcmp.gt.f32.partialorder %v307, 0.0
  %vm352 = vcmp.gt.f32.partialorder %v309, 0.0
  %vm353 = vcmp.gt.f32.partialorder %v200, 0.0
  %vm354 = vcmp.gt.f32.partialorder %v202, 0.0
  %vm355 = vcmp.gt.f32.partialorder %v313, 0.0
  %vm356 = vcmp.gt.f32.partialorder %v315, 0.0
  %vm357 = vcmp.gt.f32.partialorder %v206, 0.0
  %vm358 = vcmp.gt.f32.partialorder %v208, 0.0
  %vm359 = vcmp.gt.f32.partialorder %v319, 0.0
  %vm360 = vcmp.gt.f32.partialorder %v321, 0.0
  %vm361 = vcmp.gt.f32.partialorder %v212, 0.0
  %vm362 = vcmp.gt.f32.partialorder %v214, 0.0
  %vm363 = vcmp.gt.f32.partialorder %v325, 0.0
  %vm364 = vcmp.gt.f32.partialorder %v327, 0.0
  %vm365 = vcmp.gt.f32.partialorder %v218, 0.0
  %vm366 = vcmp.gt.f32.partialorder %v220, 0.0
  %vm367 = vcmp.gt.f32.partialorder %v331, 0.0
  %vm368 = vcmp.gt.f32.partialorder %v333, 0.0
  %vm369 = vcmp.gt.f32.partialorder %v224, 0.0
  %vm370 = vcmp.gt.f32.partialorder %v226, 0.0
  %vm371 = vcmp.gt.f32.partialorder %v337, 0.0
  %vm372 = vcmp.gt.f32.partialorder %v339, 0.0
  %v373 = vmul.f32 %v182, 0.2
  %v374 = vmul.f32 %v184, 0.2
  %v375 = vmul.f32 %v295, 0.2
  %v376 = vmul.f32 %v297, 0.2
  %v377 = vmul.f32 %v188, 0.2
  %v378 = vmul.f32 %v190, 0.2
  %v379 = vmul.f32 %v301, 0.2
  %v380 = vmul.f32 %v303, 0.2
  %v381 = vmul.f32 %v194, 0.2
  %v382 = vmul.f32 %v196, 0.2
  %v383 = vmul.f32 %v307, 0.2
  %v384 = vmul.f32 %v309, 0.2
  %v385 = vmul.f32 %v200, 0.2
  %v386 = vmul.f32 %v202, 0.2
  %v387 = vmul.f32 %v313, 0.2
  %v388 = vmul.f32 %v315, 0.2
  %v389 = vmul.f32 %v206, 0.2
  %v390 = vmul.f32 %v208, 0.2
  %v391 = vmul.f32 %v319, 0.2
  %v392 = vmul.f32 %v321, 0.2
  %v393 = vmul.f32 %v212, 0.2
  %v394 = vmul.f32 %v214, 0.2
  %v395 = vmul.f32 %v325, 0.2
  %v396 = vmul.f32 %v327, 0.2
  %v397 = vmul.f32 %v218, 0.2
  %v398 = vmul.f32 %v220, 0.2
  %v399 = vmul.f32 %v331, 0.2
  %v400 = vmul.f32 %v333, 0.2
  %v401 = vmul.f32 %v224, 0.2
  %v402 = vmul.f32 %v226, 0.2
  %v403 = vmul.f32 %v337, 0.2
  %v404 = vmul.f32 %v339, 0.2
  %v405 = vsel %vm341, %v182, %v373
  %v406 = vsel %vm342, %v184, %v374
  %v407 = vsel %vm343, %v295, %v375
  %v408 = vsel %vm344, %v297, %v376
  %v409 = vsel %vm345, %v188, %v377
  %v410 = vsel %vm346, %v190, %v378
  %v411 = vsel %vm347, %v301, %v379
  %v412 = vsel %vm348, %v303, %v380
  %v413 = vsel %vm349, %v194, %v381
  %v414 = vsel %vm350, %v196, %v382
  %v415 = vsel %vm351, %v307, %v383
  %v416 = vsel %vm352, %v309, %v384
  %v417 = vsel %vm353, %v200, %v385
  %v418 = vsel %vm354, %v202, %v386
  %v419 = vsel %vm355, %v313, %v387
  %v420 = vsel %vm356, %v315, %v388
  %v421 = vsel %vm357, %v206, %v389
  %v422 = vsel %vm358, %v208, %v390
  %v423 = vsel %vm359, %v319, %v391
  %v424 = vsel %vm360, %v321, %v392
  %v425 = vsel %vm361, %v212, %v393
  %v426 = vsel %vm362, %v214, %v394
  %v427 = vsel %vm363, %v325, %v395
  %v428 = vsel %vm364, %v327, %v396
  %v429 = vsel %vm365, %v218, %v397
  %v430 = vsel %vm366, %v220, %v398
  %v431 = vsel %vm367, %v331, %v399
  %v432 = vsel %vm368, %v333, %v400
  %v433 = vsel %vm369, %v224, %v401
  %v434 = vsel %vm370, %v226, %v402
  %v435 = vsel %vm371, %v337, %v403
  %v436 = vsel %vm372, %v339, %v404
  %v437 = vld [vmem:[%s3] sm:$0xff]
  %v438 = vld [vmem:[%s3 + $0x8] sm:$0xff]
  %v439 = vld [vmem:[%s3 + $0x10] sm:$0xff]
  %v440 = vld [vmem:[%s3 + $0x18] sm:$0xff]
  %v441 = vld [vmem:[%s3 + $0x20] sm:$0xff]
  %v442 = vld [vmem:[%s3 + $0x28] sm:$0xff]
  %v443 = vld [vmem:[%s3 + $0x30] sm:$0xff]
  %v444 = vld [vmem:[%s3 + $0x38] sm:$0xff]
  %v445 = vld [vmem:[%s3 + $0x40] sm:$0xff]
  %v446 = vld [vmem:[%s3 + $0x48] sm:$0xff]
  %v447 = vld [vmem:[%s3 + $0x50] sm:$0xff]
  %v448 = vld [vmem:[%s3 + $0x58] sm:$0xff]
  %v449 = vld [vmem:[%s3 + $0x60] sm:$0xff]
  %v450 = vld [vmem:[%s3 + $0x68] sm:$0xff]
  %v451 = vld [vmem:[%s3 + $0x70] sm:$0xff]
  %v452 = vld [vmem:[%s3 + $0x78] sm:$0xff]
  %vm453 = vcmask 523264
  %v455 = vsel %vm453, %v437, 0
  %v458 = vsel %vm453, %v438, 0
  %v461 = vsel %vm453, %v439, 0
  %v464 = vsel %vm453, %v440, 0
  %v467 = vsel %vm453, %v441, 0
  %v470 = vsel %vm453, %v442, 0
  %v473 = vsel %vm453, %v443, 0
  %v476 = vsel %vm453, %v444, 0
  %v479 = vsel %vm453, %v445, 0
  %v482 = vsel %vm453, %v446, 0
  %v485 = vsel %vm453, %v447, 0
  %v488 = vsel %vm453, %v448, 0
  %v491 = vsel %vm453, %v449, 0
  %v494 = vsel %vm453, %v450, 0
  %v497 = vsel %vm453, %v451, 0
  %v500 = vsel %vm453, %v452, 0
  %502 = vmatprep.subr.mxu0 %v406
  %503 = vmatpush1.msra.mxu0 %v405
  %504 = vmatprep.subr.mxu0 %v410
  %505 = vmatpush1.msra.mxu0 %v409
  %506 = vmatprep.subr.mxu0 %v414
  %507 = vmatpush1.msra.mxu0 %v413
  %508 = vmatprep.subr.mxu0 %v418
  %509 = vmatpush1.msra.mxu0 %v417
  %510 = vmatprep.subr.mxu0 %v422
  %511 = vmatpush1.msra.mxu0 %v421
  %512 = vmatprep.subr.mxu0 %v426
  %513 = vmatpush1.msra.mxu0 %v425
  %514 = vmatprep.subr.mxu0 %v430
  %515 = vmatpush1.msra.mxu0 %v429
  %516 = vmatprep.subr.mxu0 %v434
  %517 = vmatpush1.msra.mxu0 %v433
  %518 = vmatprep.subr.mxu0 0.0
  %519 = vmatpush1.msra.mxu0 0.0
  %520 = vmatprep.subr.mxu0 0.0
  %521 = vmatpush1.msra.mxu0 0.0
  %522 = vmatprep.subr.mxu0 0.0
  %523 = vmatpush1.msra.mxu0 0.0
  %524 = vmatprep.subr.mxu0 0.0
  %525 = vmatpush1.msra.mxu0 0.0
  %526 = vmatprep.subr.mxu0 0.0
  %527 = vmatpush1.msra.mxu0 0.0
  %528 = vmatprep.subr.mxu0 0.0
  %529 = vmatpush1.msra.mxu0 0.0
  %530 = vmatprep.subr.mxu0 0.0
  %531 = vmatpush1.msra.mxu0 0.0
  %532 = vmatprep.subr.mxu0 0.0
  %533 = vmatpush1.msra.mxu0 0.0
  %534 = vmatprep.subr.mxu0 0.0
  %535 = vmatpush1.msra.mxu0 0.0
  %536 = vmatprep.subr.mxu0 0.0
  %537 = vmatpush1.msra.mxu0 0.0
  %538 = vmatprep.subr.mxu0 0.0
  %539 = vmatpush1.msra.mxu0 0.0
  %540 = vmatprep.subr.mxu0 0.0
  %541 = vmatpush1.msra.mxu0 0.0
  %542 = vmatprep.subr.mxu0 0.0
  %543 = vmatpush1.msra.mxu0 0.0
  %544 = vmatprep.subr.mxu0 0.0
  %545 = vmatpush1.msra.mxu0 0.0
  %546 = vmatprep.subr.mxu0 0.0
  %547 = vmatpush1.msra.mxu0 0.0
  %548 = vmatprep.subr.mxu0 0.0
  %549 = vmatpush1.msra.mxu0 0.0
  %550 = vmatprep.subr.mxu0 0.0
  %551 = vmatpush1.msra.mxu0 0.0
  %552 = vmatprep.subr.mxu0 0.0
  %553 = vmatpush1.msra.mxu0 0.0
  %554 = vmatprep.subr.mxu0 0.0
  %555 = vmatpush1.msra.mxu0 0.0
  %556 = vmatprep.subr.mxu0 0.0
  %557 = vmatpush1.msra.mxu0 0.0
  %558 = vmatprep.subr.mxu0 0.0
  %559 = vmatpush1.msra.mxu0 0.0
  %560 = vmatprep.subr.mxu0 0.0
  %561 = vmatpush1.msra.mxu0 0.0
  %562 = vmatprep.subr.mxu0 0.0
  %563 = vmatpush1.msra.mxu0 0.0
  %564 = vmatprep.subr.mxu0 0.0
  %565 = vmatpush1.msra.mxu0 0.0
  %566 = vmatprep.mubr.f32.mxu0 0.0
  %567 = vmatmul.mubr.f32.gmra.mrb[0].mxu0 %v455
  %v568 = vpop.f32.mrb[0].mxu0
  %v569 = vadd.f32 0.0, %v568
  %v570 = vpop.f32.mrb[0].mxu0
  %v571 = vadd.f32 0.0, %v570
  %572 = vmatprep.mubr.f32.mxu0 0.0
  %573 = vmatmul.mubr.f32.gmra.mrb[0].mxu0 %v458
  %v574 = vpop.f32.mrb[0].mxu0
  %v575 = vadd.f32 0.0, %v574
  %v576 = vpop.f32.mrb[0].mxu0
  %v577 = vadd.f32 0.0, %v576
  %578 = vmatprep.mubr.f32.mxu0 0.0
  %579 = vmatmul.mubr.f32.gmra.mrb[0].mxu0 %v461
  %v580 = vpop.f32.mrb[0].mxu0
  %v581 = vadd.f32 0.0, %v580
  %v582 = vpop.f32.mrb[0].mxu0
  %v583 = vadd.f32 0.0, %v582
  %584 = vmatprep.mubr.f32.mxu0 0.0
  %585 = vmatmul.mubr.f32.gmra.mrb[0].mxu0 %v464
  %v586 = vpop.f32.mrb[0].mxu0
  %v587 = vadd.f32 0.0, %v586
  %v588 = vpop.f32.mrb[0].mxu0
  %v589 = vadd.f32 0.0, %v588
  %590 = vmatprep.mubr.f32.mxu0 0.0
  %591 = vmatmul.mubr.f32.gmra.mrb[0].mxu0 %v467
  %v592 = vpop.f32.mrb[0].mxu0
  %v593 = vadd.f32 0.0, %v592
  %v594 = vpop.f32.mrb[0].mxu0
  %v595 = vadd.f32 0.0, %v594
  %596 = vmatprep.mubr.f32.mxu0 0.0
  %597 = vmatmul.mubr.f32.gmra.mrb[0].mxu0 %v470
  %v598 = vpop.f32.mrb[0].mxu0
  %v599 = vadd.f32 0.0, %v598
  %v600 = vpop.f32.mrb[0].mxu0
  %v601 = vadd.f32 0.0, %v600
  %602 = vmatprep.mubr.f32.mxu0 0.0
  %603 = vmatmul.mubr.f32.gmra.mrb[0].mxu0 %v473
  %v604 = vpop.f32.mrb[0].mxu0
  %v605 = vadd.f32 0.0, %v604
  %v606 = vpop.f32.mrb[0].mxu0
  %v607 = vadd.f32 0.0, %v606
  %608 = vmatprep.mubr.f32.mxu0 0.0
  %609 = vmatmul.mubr.f32.gmra.mrb[0].mxu0 %v476
  %v610 = vpop.f32.mrb[0].mxu0
  %v611 = vadd.f32 0.0, %v610
  %v612 = vpop.f32.mrb[0].mxu0
  %v613 = vadd.f32 0.0, %v612
  %614 = vmatprep.mubr.f32.mxu0 0.0
  %615 = vmatmul.mubr.f32.gmra.mrb[0].mxu0 %v479
  %v616 = vpop.f32.mrb[0].mxu0
  %v617 = vadd.f32 0.0, %v616
  %v618 = vpop.f32.mrb[0].mxu0
  %v619 = vadd.f32 0.0, %v618
  %620 = vmatprep.mubr.f32.mxu0 0.0
  %621 = vmatmul.mubr.f32.gmra.mrb[0].mxu0 %v482
  %v622 = vpop.f32.mrb[0].mxu0
  %v623 = vadd.f32 0.0, %v622
  %v624 = vpop.f32.mrb[0].mxu0
  %v625 = vadd.f32 0.0, %v624
  %626 = vmatprep.mubr.f32.mxu0 0.0
  %627 = vmatmul.mubr.f32.gmra.mrb[0].mxu0 %v485
  %v628 = vpop.f32.mrb[0].mxu0
  %v629 = vadd.f32 0.0, %v628
  %v630 = vpop.f32.mrb[0].mxu0
  %v631 = vadd.f32 0.0, %v630
  %632 = vmatprep.mubr.f32.mxu0 0.0
  %633 = vmatmul.mubr.f32.gmra.mrb[0].mxu0 %v488
  %v634 = vpop.f32.mrb[0].mxu0
  %v635 = vadd.f32 0.0, %v634
  %v636 = vpop.f32.mrb[0].mxu0
  %v637 = vadd.f32 0.0, %v636
  %638 = vmatprep.mubr.f32.mxu0 0.0
  %639 = vmatmul.mubr.f32.gmra.mrb[0].mxu0 %v491
  %v640 = vpop.f32.mrb[0].mxu0
  %v641 = vadd.f32 0.0, %v640
  %v642 = vpop.f32.mrb[0].mxu0
  %v643 = vadd.f32 0.0, %v642
  %644 = vmatprep.mubr.f32.mxu0 0.0
  %645 = vmatmul.mubr.f32.gmra.mrb[0].mxu0 %v494
  %v646 = vpop.f32.mrb[0].mxu0
  %v647 = vadd.f32 0.0, %v646
  %v648 = vpop.f32.mrb[0].mxu0
  %v649 = vadd.f32 0.0, %v648
  %650 = vmatprep.mubr.f32.mxu0 0.0
  %651 = vmatmul.mubr.f32.gmra.mrb[0].mxu0 %v497
  %v652 = vpop.f32.mrb[0].mxu0
  %v653 = vadd.f32 0.0, %v652
  %v654 = vpop.f32.mrb[0].mxu0
  %v655 = vadd.f32 0.0, %v654
  %656 = vmatprep.mubr.f32.mxu0 0.0
  %657 = vmatmul.mubr.f32.gmra.mrb[0].mxu0 %v500
  %v658 = vpop.f32.mrb[0].mxu0
  %v659 = vadd.f32 0.0, %v658
  %v660 = vpop.f32.mrb[0].mxu0
  %v661 = vadd.f32 0.0, %v660
  %662 = vdwg.mxu0
  %663 = vmatprep.subr.mxu0 %v408
  %664 = vmatpush1.msra.mxu0 %v407
  %665 = vmatprep.subr.mxu0 %v412
  %666 = vmatpush1.msra.mxu0 %v411
  %667 = vmatprep.subr.mxu0 %v416
  %668 = vmatpush1.msra.mxu0 %v415
  %669 = vmatprep.subr.mxu0 %v420
  %670 = vmatpush1.msra.mxu0 %v419
  %671 = vmatprep.subr.mxu0 %v424
  %672 = vmatpush1.msra.mxu0 %v423
  %673 = vmatprep.subr.mxu0 %v428
  %674 = vmatpush1.msra.mxu0 %v427
  %675 = vmatprep.subr.mxu0 %v432
  %676 = vmatpush1.msra.mxu0 %v431
  %677 = vmatprep.subr.mxu0 %v436
  %678 = vmatpush1.msra.mxu0 %v435
  %679 = vmatprep.subr.mxu0 0.0
  %680 = vmatpush1.msra.mxu0 0.0
  %681 = vmatprep.subr.mxu0 0.0
  %682 = vmatpush1.msra.mxu0 0.0
  %683 = vmatprep.subr.mxu0 0.0
  %684 = vmatpush1.msra.mxu0 0.0
  %685 = vmatprep.subr.mxu0 0.0
  %686 = vmatpush1.msra.mxu0 0.0
  %687 = vmatprep.subr.mxu0 0.0
  %688 = vmatpush1.msra.mxu0 0.0
  %689 = vmatprep.subr.mxu0 0.0
  %690 = vmatpush1.msra.mxu0 0.0
  %691 = vmatprep.subr.mxu0 0.0
  %692 = vmatpush1.msra.mxu0 0.0
  %693 = vmatprep.subr.mxu0 0.0
  %694 = vmatpush1.msra.mxu0 0.0
  %695 = vmatprep.subr.mxu0 0.0
  %696 = vmatpush1.msra.mxu0 0.0
  %697 = vmatprep.subr.mxu0 0.0
  %698 = vmatpush1.msra.mxu0 0.0
  %699 = vmatprep.subr.mxu0 0.0
  %700 = vmatpush1.msra.mxu0 0.0
  %701 = vmatprep.subr.mxu0 0.0
  %702 = vmatpush1.msra.mxu0 0.0
  %703 = vmatprep.subr.mxu0 0.0
  %704 = vmatpush1.msra.mxu0 0.0
  %705 = vmatprep.subr.mxu0 0.0
  %706 = vmatpush1.msra.mxu0 0.0
  %707 = vmatprep.subr.mxu0 0.0
  %708 = vmatpush1.msra.mxu0 0.0
  %709 = vmatprep.subr.mxu0 0.0
  %710 = vmatpush1.msra.mxu0 0.0
  %711 = vmatprep.subr.mxu0 0.0
  %712 = vmatpush1.msra.mxu0 0.0
  %713 = vmatprep.subr.mxu0 0.0
  %714 = vmatpush1.msra.mxu0 0.0
  %715 = vmatprep.subr.mxu0 0.0
  %716 = vmatpush1.msra.mxu0 0.0
  %717 = vmatprep.subr.mxu0 0.0
  %718 = vmatpush1.msra.mxu0 0.0
  %719 = vmatprep.subr.mxu0 0.0
  %720 = vmatpush1.msra.mxu0 0.0
  %721 = vmatprep.subr.mxu0 0.0
  %722 = vmatpush1.msra.mxu0 0.0
  %723 = vmatprep.subr.mxu0 0.0
  %724 = vmatpush1.msra.mxu0 0.0
  %725 = vmatprep.subr.mxu0 0.0
  %726 = vmatpush1.msra.mxu0 0.0
  %727 = vmatprep.mubr.f32.mxu0 0.0
  %728 = vmatmul.mubr.f32.gmra.mrb[0].mxu0 %v455
  %v729 = vpop.f32.mrb[0].mxu0
  %v730 = vadd.f32 0.0, %v729
  %v731 = vpop.f32.mrb[0].mxu0
  %v732 = vadd.f32 0.0, %v731
  %733 = vmatprep.mubr.f32.mxu0 0.0
  %734 = vmatmul.mubr.f32.gmra.mrb[0].mxu0 %v458
  %v735 = vpop.f32.mrb[0].mxu0
  %v736 = vadd.f32 0.0, %v735
  %v737 = vpop.f32.mrb[0].mxu0
  %v738 = vadd.f32 0.0, %v737
  %739 = vmatprep.mubr.f32.mxu0 0.0
  %740 = vmatmul.mubr.f32.gmra.mrb[0].mxu0 %v461
  %v741 = vpop.f32.mrb[0].mxu0
  %v742 = vadd.f32 0.0, %v741
  %v743 = vpop.f32.mrb[0].mxu0
  %v744 = vadd.f32 0.0, %v743
  %745 = vmatprep.mubr.f32.mxu0 0.0
  %746 = vmatmul.mubr.f32.gmra.mrb[0].mxu0 %v464
  %v747 = vpop.f32.mrb[0].mxu0
  %v748 = vadd.f32 0.0, %v747
  %v749 = vpop.f32.mrb[0].mxu0
  %v750 = vadd.f32 0.0, %v749
  %751 = vmatprep.mubr.f32.mxu0 0.0
  %752 = vmatmul.mubr.f32.gmra.mrb[0].mxu0 %v467
  %v753 = vpop.f32.mrb[0].mxu0
  %v754 = vadd.f32 0.0, %v753
  %v755 = vpop.f32.mrb[0].mxu0
  %v756 = vadd.f32 0.0, %v755
  %757 = vmatprep.mubr.f32.mxu0 0.0
  %758 = vmatmul.mubr.f32.gmra.mrb[0].mxu0 %v470
  %v759 = vpop.f32.mrb[0].mxu0
  %v760 = vadd.f32 0.0, %v759
  %v761 = vpop.f32.mrb[0].mxu0
  %v762 = vadd.f32 0.0, %v761
  %763 = vmatprep.mubr.f32.mxu0 0.0
  %764 = vmatmul.mubr.f32.gmra.mrb[0].mxu0 %v473
  %v765 = vpop.f32.mrb[0].mxu0
  %v766 = vadd.f32 0.0, %v765
  %v767 = vpop.f32.mrb[0].mxu0
  %v768 = vadd.f32 0.0, %v767
  %769 = vmatprep.mubr.f32.mxu0 0.0
  %770 = vmatmul.mubr.f32.gmra.mrb[0].mxu0 %v476
  %v771 = vpop.f32.mrb[0].mxu0
  %v772 = vadd.f32 0.0, %v771
  %v773 = vpop.f32.mrb[0].mxu0
  %v774 = vadd.f32 0.0, %v773
  %775 = vmatprep.mubr.f32.mxu0 0.0
  %776 = vmatmul.mubr.f32.gmra.mrb[0].mxu0 %v479
  %v777 = vpop.f32.mrb[0].mxu0
  %v778 = vadd.f32 0.0, %v777
  %v779 = vpop.f32.mrb[0].mxu0
  %v780 = vadd.f32 0.0, %v779
  %781 = vmatprep.mubr.f32.mxu0 0.0
  %782 = vmatmul.mubr.f32.gmra.mrb[0].mxu0 %v482
  %v783 = vpop.f32.mrb[0].mxu0
  %v784 = vadd.f32 0.0, %v783
  %v785 = vpop.f32.mrb[0].mxu0
  %v786 = vadd.f32 0.0, %v785
  %787 = vmatprep.mubr.f32.mxu0 0.0
  %788 = vmatmul.mubr.f32.gmra.mrb[0].mxu0 %v485
  %v789 = vpop.f32.mrb[0].mxu0
  %v790 = vadd.f32 0.0, %v789
  %v791 = vpop.f32.mrb[0].mxu0
  %v792 = vadd.f32 0.0, %v791
  %793 = vmatprep.mubr.f32.mxu0 0.0
  %794 = vmatmul.mubr.f32.gmra.mrb[0].mxu0 %v488
  %v795 = vpop.f32.mrb[0].mxu0
  %v796 = vadd.f32 0.0, %v795
  %v797 = vpop.f32.mrb[0].mxu0
  %v798 = vadd.f32 0.0, %v797
  %799 = vmatprep.mubr.f32.mxu0 0.0
  %800 = vmatmul.mubr.f32.gmra.mrb[0].mxu0 %v491
  %v801 = vpop.f32.mrb[0].mxu0
  %v802 = vadd.f32 0.0, %v801
  %v803 = vpop.f32.mrb[0].mxu0
  %v804 = vadd.f32 0.0, %v803
  %805 = vmatprep.mubr.f32.mxu0 0.0
  %806 = vmatmul.mubr.f32.gmra.mrb[0].mxu0 %v494
  %v807 = vpop.f32.mrb[0].mxu0
  %v808 = vadd.f32 0.0, %v807
  %v809 = vpop.f32.mrb[0].mxu0
  %v810 = vadd.f32 0.0, %v809
  %811 = vmatprep.mubr.f32.mxu0 0.0
  %812 = vmatmul.mubr.f32.gmra.mrb[0].mxu0 %v497
  %v813 = vpop.f32.mrb[0].mxu0
  %v814 = vadd.f32 0.0, %v813
  %v815 = vpop.f32.mrb[0].mxu0
  %v816 = vadd.f32 0.0, %v815
  %817 = vmatprep.mubr.f32.mxu0 0.0
  %818 = vmatmul.mubr.f32.gmra.mrb[0].mxu0 %v500
  %v819 = vpop.f32.mrb[0].mxu0
  %v820 = vadd.f32 0.0, %v819
  %v821 = vpop.f32.mrb[0].mxu0
  %v822 = vadd.f32 0.0, %v821
  %823 = vdwg.mxu0
  %v824 = vadd.f32 %v569, %v571
  %v825 = vadd.f32 %v824, %v730
  %v826 = vadd.f32 %v825, %v732
  %827 = vadd.xlane.f32.xlu0 %v826
  %v828 = vpop.xlane.xlu0 %827
  %v829 = vadd.f32 %v575, %v577
  %v830 = vadd.f32 %v829, %v736
  %v831 = vadd.f32 %v830, %v738
  %832 = vadd.xlane.f32.xlu0 %v831
  %v833 = vpop.xlane.xlu0 %832
  %v834 = vadd.f32 %v581, %v583
  %v835 = vadd.f32 %v834, %v742
  %v836 = vadd.f32 %v835, %v744
  %837 = vadd.xlane.f32.xlu0 %v836
  %v838 = vpop.xlane.xlu0 %837
  %v839 = vadd.f32 %v587, %v589
  %v840 = vadd.f32 %v839, %v748
  %v841 = vadd.f32 %v840, %v750
  %842 = vadd.xlane.f32.xlu0 %v841
  %v843 = vpop.xlane.xlu0 %842
  %v844 = vadd.f32 %v593, %v595
  %v845 = vadd.f32 %v844, %v754
  %v846 = vadd.f32 %v845, %v756
  %847 = vadd.xlane.f32.xlu0 %v846
  %v848 = vpop.xlane.xlu0 %847
  %v849 = vadd.f32 %v599, %v601
  %v850 = vadd.f32 %v849, %v760
  %v851 = vadd.f32 %v850, %v762
  %852 = vadd.xlane.f32.xlu0 %v851
  %v853 = vpop.xlane.xlu0 %852
  %v854 = vadd.f32 %v605, %v607
  %v855 = vadd.f32 %v854, %v766
  %v856 = vadd.f32 %v855, %v768
  %857 = vadd.xlane.f32.xlu0 %v856
  %v858 = vpop.xlane.xlu0 %857
  %v859 = vadd.f32 %v611, %v613
  %v860 = vadd.f32 %v859, %v772
  %v861 = vadd.f32 %v860, %v774
  %862 = vadd.xlane.f32.xlu0 %v861
  %v863 = vpop.xlane.xlu0 %862
  %v864 = vadd.f32 %v617, %v619
  %v865 = vadd.f32 %v864, %v778
  %v866 = vadd.f32 %v865, %v780
  %867 = vadd.xlane.f32.xlu0 %v866
  %v868 = vpop.xlane.xlu0 %867
  %v869 = vadd.f32 %v623, %v625
  %v870 = vadd.f32 %v869, %v784
  %v871 = vadd.f32 %v870, %v786
  %872 = vadd.xlane.f32.xlu0 %v871
  %v873 = vpop.xlane.xlu0 %872
  %v874 = vadd.f32 %v629, %v631
  %v875 = vadd.f32 %v874, %v790
  %v876 = vadd.f32 %v875, %v792
  %877 = vadd.xlane.f32.xlu0 %v876
  %v878 = vpop.xlane.xlu0 %877
  %v879 = vadd.f32 %v635, %v637
  %v880 = vadd.f32 %v879, %v796
  %v881 = vadd.f32 %v880, %v798
  %882 = vadd.xlane.f32.xlu0 %v881
  %v883 = vpop.xlane.xlu0 %882
  %v884 = vadd.f32 %v641, %v643
  %v885 = vadd.f32 %v884, %v802
  %v886 = vadd.f32 %v885, %v804
  %887 = vadd.xlane.f32.xlu0 %v886
  %v888 = vpop.xlane.xlu0 %887
  %v889 = vadd.f32 %v647, %v649
  %v890 = vadd.f32 %v889, %v808
  %v891 = vadd.f32 %v890, %v810
  %892 = vadd.xlane.f32.xlu0 %v891
  %v893 = vpop.xlane.xlu0 %892
  %v894 = vadd.f32 %v653, %v655
  %v895 = vadd.f32 %v894, %v814
  %v896 = vadd.f32 %v895, %v816
  %897 = vadd.xlane.f32.xlu0 %v896
  %v898 = vpop.xlane.xlu0 %897
  %v899 = vadd.f32 %v659, %v661
  %v900 = vadd.f32 %v899, %v820
  %v901 = vadd.f32 %v900, %v822
  %902 = vadd.xlane.f32.xlu0 %v901
  %v903 = vpop.xlane.xlu0 %902
  %vm904 = vcmask 7168
  %905 = vst.msk [vmem:[%s4] sm:$0xff] %vm904, %v828
  %906 = vst.msk [vmem:[%s4 + $0x8] sm:$0xff] %vm904, %v833
  %907 = vst.msk [vmem:[%s4 + $0x10] sm:$0xff] %vm904, %v838
  %908 = vst.msk [vmem:[%s4 + $0x18] sm:$0xff] %vm904, %v843
  %909 = vst.msk [vmem:[%s4 + $0x20] sm:$0xff] %vm904, %v848
  %910 = vst.msk [vmem:[%s4 + $0x28] sm:$0xff] %vm904, %v853
  %911 = vst.msk [vmem:[%s4 + $0x30] sm:$0xff] %vm904, %v858
  %912 = vst.msk [vmem:[%s4 + $0x38] sm:$0xff] %vm904, %v863
  %913 = vst.msk [vmem:[%s4 + $0x40] sm:$0xff] %vm904, %v868
  %914 = vst.msk [vmem:[%s4 + $0x48] sm:$0xff] %vm904, %v873
  %915 = vst.msk [vmem:[%s4 + $0x50] sm:$0xff] %vm904, %v878
  %916 = vst.msk [vmem:[%s4 + $0x58] sm:$0xff] %vm904, %v883
  %917 = vst.msk [vmem:[%s4 + $0x60] sm:$0xff] %vm904, %v888
  %918 = vst.msk [vmem:[%s4 + $0x68] sm:$0xff] %vm904, %v893
  %919 = vst.msk [vmem:[%s4 + $0x70] sm:$0xff] %vm904, %v898
  %920 = vst.msk [vmem:[%s4 + $0x78] sm:$0xff] %vm904, %v903
  %v921 = vmul.f32 %v569, %v569
  %v922 = vmul.f32 %v571, %v571
  %v923 = vmul.f32 %v730, %v730
  %v924 = vmul.f32 %v732, %v732
  %v925 = vmul.f32 %v575, %v575
  %v926 = vmul.f32 %v577, %v577
  %v927 = vmul.f32 %v736, %v736
  %v928 = vmul.f32 %v738, %v738
  %v929 = vmul.f32 %v581, %v581
  %v930 = vmul.f32 %v583, %v583
  %v931 = vmul.f32 %v742, %v742
  %v932 = vmul.f32 %v744, %v744
  %v933 = vmul.f32 %v587, %v587
  %v934 = vmul.f32 %v589, %v589
  %v935 = vmul.f32 %v748, %v748
  %v936 = vmul.f32 %v750, %v750
  %v937 = vmul.f32 %v593, %v593
  %v938 = vmul.f32 %v595, %v595
  %v939 = vmul.f32 %v754, %v754
  %v940 = vmul.f32 %v756, %v756
  %v941 = vmul.f32 %v599, %v599
  %v942 = vmul.f32 %v601, %v601
  %v943 = vmul.f32 %v760, %v760
  %v944 = vmul.f32 %v762, %v762
  %v945 = vmul.f32 %v605, %v605
  %v946 = vmul.f32 %v607, %v607
  %v947 = vmul.f32 %v766, %v766
  %v948 = vmul.f32 %v768, %v768
  %v949 = vmul.f32 %v611, %v611
  %v950 = vmul.f32 %v613, %v613
  %v951 = vmul.f32 %v772, %v772
  %v952 = vmul.f32 %v774, %v774
  %v953 = vmul.f32 %v617, %v617
  %v954 = vmul.f32 %v619, %v619
  %v955 = vmul.f32 %v778, %v778
  %v956 = vmul.f32 %v780, %v780
  %v957 = vmul.f32 %v623, %v623
  %v958 = vmul.f32 %v625, %v625
  %v959 = vmul.f32 %v784, %v784
  %v960 = vmul.f32 %v786, %v786
  %v961 = vmul.f32 %v629, %v629
  %v962 = vmul.f32 %v631, %v631
  %v963 = vmul.f32 %v790, %v790
  %v964 = vmul.f32 %v792, %v792
  %v965 = vmul.f32 %v635, %v635
  %v966 = vmul.f32 %v637, %v637
  %v967 = vmul.f32 %v796, %v796
  %v968 = vmul.f32 %v798, %v798
  %v969 = vmul.f32 %v641, %v641
  %v970 = vmul.f32 %v643, %v643
  %v971 = vmul.f32 %v802, %v802
  %v972 = vmul.f32 %v804, %v804
  %v973 = vmul.f32 %v647, %v647
  %v974 = vmul.f32 %v649, %v649
  %v975 = vmul.f32 %v808, %v808
  %v976 = vmul.f32 %v810, %v810
  %v977 = vmul.f32 %v653, %v653
  %v978 = vmul.f32 %v655, %v655
  %v979 = vmul.f32 %v814, %v814
  %v980 = vmul.f32 %v816, %v816
  %v981 = vmul.f32 %v659, %v659
  %v982 = vmul.f32 %v661, %v661
  %v983 = vmul.f32 %v820, %v820
  %v984 = vmul.f32 %v822, %v822
  %v985 = vadd.f32 %v921, %v922
  %v986 = vadd.f32 %v985, %v923
  %v987 = vadd.f32 %v986, %v924
  %988 = vadd.xlane.f32.xlu0 %v987
  %v989 = vpop.xlane.xlu0 %988
  %v990 = vadd.f32 %v925, %v926
  %v991 = vadd.f32 %v990, %v927
  %v992 = vadd.f32 %v991, %v928
  %993 = vadd.xlane.f32.xlu0 %v992
  %v994 = vpop.xlane.xlu0 %993
  %v995 = vadd.f32 %v929, %v930
  %v996 = vadd.f32 %v995, %v931
  %v997 = vadd.f32 %v996, %v932
  %998 = vadd.xlane.f32.xlu0 %v997
  %v999 = vpop.xlane.xlu0 %998
  %v1000 = vadd.f32 %v933, %v934
  %v1001 = vadd.f32 %v1000, %v935
  %v1002 = vadd.f32 %v1001, %v936
  %1003 = vadd.xlane.f32.xlu0 %v1002
  %v1004 = vpop.xlane.xlu0 %1003
  %v1005 = vadd.f32 %v937, %v938
  %v1006 = vadd.f32 %v1005, %v939
  %v1007 = vadd.f32 %v1006, %v940
  %1008 = vadd.xlane.f32.xlu0 %v1007
  %v1009 = vpop.xlane.xlu0 %1008
  %v1010 = vadd.f32 %v941, %v942
  %v1011 = vadd.f32 %v1010, %v943
  %v1012 = vadd.f32 %v1011, %v944
  %1013 = vadd.xlane.f32.xlu0 %v1012
  %v1014 = vpop.xlane.xlu0 %1013
  %v1015 = vadd.f32 %v945, %v946
  %v1016 = vadd.f32 %v1015, %v947
  %v1017 = vadd.f32 %v1016, %v948
  %1018 = vadd.xlane.f32.xlu0 %v1017
  %v1019 = vpop.xlane.xlu0 %1018
  %v1020 = vadd.f32 %v949, %v950
  %v1021 = vadd.f32 %v1020, %v951
  %v1022 = vadd.f32 %v1021, %v952
  %1023 = vadd.xlane.f32.xlu0 %v1022
  %v1024 = vpop.xlane.xlu0 %1023
  %v1025 = vadd.f32 %v953, %v954
  %v1026 = vadd.f32 %v1025, %v955
  %v1027 = vadd.f32 %v1026, %v956
  %1028 = vadd.xlane.f32.xlu0 %v1027
  %v1029 = vpop.xlane.xlu0 %1028
  %v1030 = vadd.f32 %v957, %v958
  %v1031 = vadd.f32 %v1030, %v959
  %v1032 = vadd.f32 %v1031, %v960
  %1033 = vadd.xlane.f32.xlu0 %v1032
  %v1034 = vpop.xlane.xlu0 %1033
  %v1035 = vadd.f32 %v961, %v962
  %v1036 = vadd.f32 %v1035, %v963
  %v1037 = vadd.f32 %v1036, %v964
  %1038 = vadd.xlane.f32.xlu0 %v1037
  %v1039 = vpop.xlane.xlu0 %1038
  %v1040 = vadd.f32 %v965, %v966
  %v1041 = vadd.f32 %v1040, %v967
  %v1042 = vadd.f32 %v1041, %v968
  %1043 = vadd.xlane.f32.xlu0 %v1042
  %v1044 = vpop.xlane.xlu0 %1043
  %v1045 = vadd.f32 %v969, %v970
  %v1046 = vadd.f32 %v1045, %v971
  %v1047 = vadd.f32 %v1046, %v972
  %1048 = vadd.xlane.f32.xlu0 %v1047
  %v1049 = vpop.xlane.xlu0 %1048
  %v1050 = vadd.f32 %v973, %v974
  %v1051 = vadd.f32 %v1050, %v975
  %v1052 = vadd.f32 %v1051, %v976
  %1053 = vadd.xlane.f32.xlu0 %v1052
  %v1054 = vpop.xlane.xlu0 %1053
  %v1055 = vadd.f32 %v977, %v978
  %v1056 = vadd.f32 %v1055, %v979
  %v1057 = vadd.f32 %v1056, %v980
  %1058 = vadd.xlane.f32.xlu0 %v1057
  %v1059 = vpop.xlane.xlu0 %1058
  %v1060 = vadd.f32 %v981, %v982
  %v1061 = vadd.f32 %v1060, %v983
  %v1062 = vadd.f32 %v1061, %v984
  %1063 = vadd.xlane.f32.xlu0 %v1062
  %v1064 = vpop.xlane.xlu0 %1063
  %1065 = vst.msk [vmem:[%s5] sm:$0xff] %vm904, %v989
  %1066 = vst.msk [vmem:[%s5 + $0x8] sm:$0xff] %vm904, %v994
  %1067 = vst.msk [vmem:[%s5 + $0x10] sm:$0xff] %vm904, %v999
  %1068 = vst.msk [vmem:[%s5 + $0x18] sm:$0xff] %vm904, %v1004
  %1069 = vst.msk [vmem:[%s5 + $0x20] sm:$0xff] %vm904, %v1009
  %1070 = vst.msk [vmem:[%s5 + $0x28] sm:$0xff] %vm904, %v1014
  %1071 = vst.msk [vmem:[%s5 + $0x30] sm:$0xff] %vm904, %v1019
  %1072 = vst.msk [vmem:[%s5 + $0x38] sm:$0xff] %vm904, %v1024
  %1073 = vst.msk [vmem:[%s5 + $0x40] sm:$0xff] %vm904, %v1029
  %1074 = vst.msk [vmem:[%s5 + $0x48] sm:$0xff] %vm904, %v1034
  %1075 = vst.msk [vmem:[%s5 + $0x50] sm:$0xff] %vm904, %v1039
  %1076 = vst.msk [vmem:[%s5 + $0x58] sm:$0xff] %vm904, %v1044
  %1077 = vst.msk [vmem:[%s5 + $0x60] sm:$0xff] %vm904, %v1049
  %1078 = vst.msk [vmem:[%s5 + $0x68] sm:$0xff] %vm904, %v1054
  %1079 = vst.msk [vmem:[%s5 + $0x70] sm:$0xff] %vm904, %v1059
  %1080 = vst.msk [vmem:[%s5 + $0x78] sm:$0xff] %vm904, %v1064
  // Predicated region
  $region18: #{tpu_custom_call.1} parent=0 // pred_check
    _
  $region19: #{tpu_custom_call.1} parent=0 // pred_check_branch
    %1082 = sbr.rel (0) target = $region21
  $region20: #{tpu_custom_call.1} parent=0 // pred_region
    _
  $region21: #{tpu_custom_call.1} parent=0 // pred_fallthru
    _
  // Predicated region
  $region22: #{tpu_custom_call.1} parent=0 // pred_check
    _
  $region23: #{tpu_custom_call.1} parent=0 // pred_check_branch
    %1084 = sbr.rel (0) target = $region25
  $region24: #{tpu_custom_call.1} parent=0 // pred_region
    _
  $region25: #{tpu_custom_call.1} parent=0 // pred_fallthru
    _
  // Predicated region
  $region26: #{tpu_custom_call.1} parent=0 // pred_check
    _
  $region27: #{tpu_custom_call.1} parent=0 // pred_check_branch
    %1086 = sbr.rel (0) target = $region29
  $region28: #{tpu_custom_call.1} parent=0 // pred_region
    _
  $region29: #{tpu_custom_call.1} parent=0 // pred_fallthru
    _
  // Predicated region
  $region30: #{tpu_custom_call.1} parent=0 // pred_check
    _
  $region31: #{tpu_custom_call.1} parent=0 // pred_check_branch
    %1088 = sbr.rel (0) target = $region33
  $region32: #{tpu_custom_call.1} parent=0 // pred_region
    _
  $region33: #{tpu_custom_call.1} parent=0 // pred_fallthru
    _

</llo_original>
